<compile_context>
chip_gen: v7x
topology: tpu7x:2x2x1
jax: 0.10.0
libtpu: 0.0.40
codegen_flags: <defaults>
</compile_context>

<pallas_src>
import jax
import jax.numpy as jnp
from jax.experimental import pallas as pl
from jax.experimental.pallas import tpu as pltpu


def _round_up(n, m):
    return ((n + m - 1) // m) * m


def _cdiv(a, b):
    return (a + b - 1) // b


def _elu(x):
    # torch.nn.ELU(alpha=1.0).  The exp argument is clamped to <= 0 so the
    # untaken branch stays finite; for x <= 0, exp(x)-1 has abs error ~1e-7.
    # TODO(synk): switch to jnp.expm1 in-kernel once Mosaic lowers lax.expm1_p.
    return jnp.where(x > 0, x, jnp.exp(jnp.minimum(x, 0.0)) - 1.0)


# -----------------------------------------------------------------------------
# Kernel — everything in transposed (features, TM) layout: batch on lanes.
# -----------------------------------------------------------------------------
def classifier_kernel(x_ref, w0_ref, b0_ref, w1_ref, b1_ref,
                      w2_ref, b2_ref, w3_ref, b3_ref, out_ref):
    f32, bf16 = jnp.float32, jnp.bfloat16

    # Layer 0: (BN0 folded) Linear 32->64 + ELU, as A @ B^T against the (TM, 32)
    # x tile:  h0^T = w0 (64,32) . x^T  -> (64, TM), lane-dense downstream.
    h = jax.lax.dot_general(
        w0_ref[...], x_ref[...].astype(bf16),
        dimension_numbers=(((1,), (1,)), ((), ())),
        preferred_element_type=f32) + b0_ref[...]                 # (64, TM)
    h = _elu(h)

    # Layer 1: (BN1 folded) Linear 64->64 + ELU.
    h = jnp.dot(w1_ref[...], h.astype(bf16),
                preferred_element_type=f32) + b1_ref[...]         # (64, TM)
    h = _elu(h)

    # Layer 2: Linear 64->32 + ReLU.
    h = jnp.dot(w2_ref[...], h.astype(bf16),
                preferred_element_type=f32) + b2_ref[...]         # (32, TM)
    h = jnp.maximum(h, 0.0)

    # Final (BN2 folded) Linear 32->1 + sigmoid: VPU multiply + sublane reduce
    # (no MXU pass for the width-1 projection); sigmoid via tanh (one EUP op,
    # stable for any logit magnitude).
    logits = jnp.sum(h * w3_ref[...], axis=0, keepdims=True) + b3_ref[...]  # (1, TM)
    probs = 0.5 * (jnp.tanh(0.5 * logits) + 1.0)
    out_ref[...] = probs[None]                                    # (1, 1, TM) lane-dense


# -----------------------------------------------------------------------------
# Wrapper
# -----------------------------------------------------------------------------
def _choose_tile_m(n, tile_m):
    """Batch tile sized for DMA efficiency / per-step overhead (~0.35us fixed per
    grid step), not MXU height.  Capped by (a) the padded batch itself and
    (b) keeping >= 2 grid steps so v7x's two TensorCores both get work."""
    n_pad8 = _round_up(max(n, 1), 8)
    if n_pad8 <= 128:
        return n_pad8                           # tiny batch: single small tile
    half = _round_up(_cdiv(n_pad8, 2), 128)     # >= 2 lane-dense steps
    return max(128, min(tile_m, half))


def classifier_forward(x, kparams, tile_m=2048):
    """Classifier forward.  x: (batch, 32) f32 (or bf16) -> (batch,) f32 probs.

    If the producer already has bf16 activations, pass them straight in: the
    in-kernel cast is a no-op and HBM traffic roughly halves.  No wrapper-side
    cast is added (that would be a separate XLA HBM read+write pass).
    """
    n, in_dim = x.shape
    tm = _choose_tile_m(n, tile_m)
    n_pad = _round_up(n, tm)
    if n_pad != n:
        x = jnp.pad(x, ((0, n_pad - n), (0, 0)))
    num_tiles = n_pad // tm

    weights = [kparams["w0"], kparams["b0"], kparams["w1"], kparams["b1"],
               kparams["w2"], kparams["b2"], kparams["w3"], kparams["b3"]]

    # Weights/biases: whole-array blocks with constant index_maps -> fetched once
    # and kept VMEM-resident for all grid steps.
    def const_spec(a):
        return pl.BlockSpec(a.shape, lambda i, _nd=a.ndim: (0,) * _nd)

    in_specs = ([pl.BlockSpec((tm, in_dim), lambda i: (i, 0))]
                + [const_spec(a) for a in weights])
    # Lane-dense output: one (1, TM) row of probabilities per grid step.
    out_spec = pl.BlockSpec((1, 1, tm), lambda i: (i, 0, 0))

    h0, h1, h2 = (kparams["w0"].shape[0], kparams["w1"].shape[0],
                  kparams["w2"].shape[0])
    weight_bytes = int(sum(a.size * a.dtype.itemsize for a in weights))
    cost = pl.CostEstimate(
        flops=int(2 * n_pad * (in_dim * h0 + h0 * h1 + h1 * h2 + h2)),
        transcendentals=int(n_pad * (h0 + h1 + 1)),
        bytes_accessed=int(n_pad * (in_dim * x.dtype.itemsize + 4) + weight_bytes),
    )

    # NOTE: if xprof still shows exposed input DMA at large TM, add
    # pipeline_mode=pl.Buffered(3) to in_specs[0]; skipped by default.
    out = pl.pallas_call(
        classifier_kernel,
        out_shape=jax.ShapeDtypeStruct((num_tiles, 1, tm), jnp.float32),
        grid=(num_tiles,),
        in_specs=in_specs,
        out_specs=out_spec,
        compiler_params=pltpu.CompilerParams(
            dimension_semantics=("parallel",)),   # megacore split on v7x
        cost_estimate=cost,
    )(x, *weights)

    # torch: probabilities.squeeze(1)
    return out.reshape(n_pad)[:n]


# -----------------------------------------------------------------------------
# Parameters (torch layout) + host-side BN folding into kernel layout
# -----------------------------------------------------------------------------
def make_params(key, in_dim=32, h0=64, h1=64, h2=32, out_dim=1):
    """Random torch-layout params: Linear.weight (out,in); BN gamma/beta/mean/var."""
    ks = iter(jax.random.split(key, 24))

    def bn(f):
        return {"gamma": jax.random.uniform(next(ks), (f,), jnp.float32, 0.5, 1.5),
                "beta": 0.1 * jax.random.normal(next(ks), (f,), jnp.float32),
                "mean": 0.1 * jax.random.normal(next(ks), (f,), jnp.float32),
                "var": jax.random.uniform(next(ks), (f,), jnp.float32, 0.5, 1.5)}

    def lin(fin, fout):
        return {"w": jax.random.normal(next(ks), (fout, fin), jnp.float32) / jnp.sqrt(fin),
                "b": 0.1 * jax.random.normal(next(ks), (fout,), jnp.float32)}

    return {"bn0": bn(in_dim), "lin0": lin(in_dim, h0),
            "bn1": bn(h0), "lin1": lin(h0, h1),
            "lin2": lin(h1, h2),
            "bn2": bn(h2), "lin3": lin(h2, out_dim)}


def fold_params(raw, eps=1e-5):
    """Fold eval-mode BatchNorms into the adjacent Linear layers (host algebra)
    and lay weights out in (out, in) orientation for the transposed kernel;
    MXU operands cast to bf16, VPU-path weights stay f32."""
    def scale_shift(p):
        s = p["gamma"] / jnp.sqrt(p["var"] + eps)
        return s, p["beta"] - p["mean"] * s

    s0, t0 = scale_shift(raw["bn0"])
    s1, t1 = scale_shift(raw["bn1"])
    s2, t2 = scale_shift(raw["bn2"])
    W0, c0 = raw["lin0"]["w"], raw["lin0"]["b"]
    W1, c1 = raw["lin1"]["w"], raw["lin1"]["b"]
    W2, c2 = raw["lin2"]["w"], raw["lin2"]["b"]
    W3, c3 = raw["lin3"]["w"], raw["lin3"]["b"]

    return {
        # ELU((x*s0+t0) @ W0^T + c0)^T == ELU(w0 . x^T + b0) with w0 = W0*s0[None,:]
        "w0": (W0 * s0[None, :]).astype(jnp.bfloat16),          # (h0, in)
        "b0": (t0 @ W0.T + c0)[:, None].astype(jnp.float32),    # (h0, 1)
        "w1": (W1 * s1[None, :]).astype(jnp.bfloat16),          # (h1, h0)
        "b1": (t1 @ W1.T + c1)[:, None].astype(jnp.float32),    # (h1, 1)
        "w2": W2.astype(jnp.bfloat16),                          # (h2, h1)
        "b2": c2[:, None].astype(jnp.float32),                  # (h2, 1)
        # logits^T = sum_k w3[k] * h2^T[k,:] + b3   (VPU path -> f32)
        "w3": (s2[:, None] * W3.T).astype(jnp.float32),         # (h2, 1)
        "b3": (t2 @ W3.T + c3)[None, :].astype(jnp.float32),    # (1, 1)
    }


# -----------------------------------------------------------------------------
# Pure-JAX references
# -----------------------------------------------------------------------------
def classifier_ref_f32(x, raw, eps=1e-5):
    """Torch forward semantics: f32 everywhere, unfolded eval-mode BN."""
    def bn(v, p):
        return (v - p["mean"]) / jnp.sqrt(p["var"] + eps) * p["gamma"] + p["beta"]

    def elu(v):
        return jnp.where(v > 0, v, jnp.expm1(jnp.minimum(v, 0.0)))

    h = bn(x, raw["bn0"])
    h = elu(h @ raw["lin0"]["w"].T + raw["lin0"]["b"])
    h = bn(h, raw["bn1"])
    h = elu(h @ raw["lin1"]["w"].T + raw["lin1"]["b"])
    h = jnp.maximum(h @ raw["lin2"]["w"].T + raw["lin2"]["b"], 0.0)
    h = bn(h, raw["bn2"])
    logits = h @ raw["lin3"]["w"].T + raw["lin3"]["b"]
    return jax.nn.sigmoid(logits)[:, 0]


def classifier_ref_matched(x, kp):
    """Reference mirroring the kernel numerics (folded BN, bf16 MXU operands,
    transposed layout, tanh-form sigmoid)."""
    f32, bf16 = jnp.float32, jnp.bfloat16
    h = jax.lax.dot_general(kp["w0"], x.astype(bf16),
                            dimension_numbers=(((1,), (1,)), ((), ())),
                            preferred_element_type=f32) + kp["b0"]
    h = _elu(h)
    h = jnp.dot(kp["w1"], h.astype(bf16), preferred_element_type=f32) + kp["b1"]
    h = _elu(h)
    h = jnp.dot(kp["w2"], h.astype(bf16), preferred_element_type=f32) + kp["b2"]
    h = jnp.maximum(h, 0.0)
    logits = jnp.sum(h * kp["w3"], axis=0) + kp["b3"][0, 0]        # (n,)
    return 0.5 * (jnp.tanh(0.5 * logits) + 1.0)


if __name__ == "__main__":
    key = jax.random.PRNGKey(0)
    kx, kp_key = jax.random.split(key)
    batch, in_dim = 200, 32          # 200 exercises padding + the 2-step grid
    x = jax.random.normal(kx, (batch, in_dim), jnp.float32)

    raw = make_params(kp_key, in_dim=in_dim)
    kparams = fold_params(raw)

    out = classifier_forward(x, kparams)          # tm=128 here -> grid=(2,)
    out = jax.block_until_ready(out)
    assert out.shape == (batch,)

    ref_matched = classifier_ref_matched(x, kparams)   # same numerics as the kernel
    ref_f32 = classifier_ref_f32(x, raw)               # exact torch f32 semantics
    assert jnp.allclose(out, ref_matched, atol=5e-3, rtol=5e-3), (
        float(jnp.max(jnp.abs(out - ref_matched))))
    assert jnp.allclose(out, ref_f32, atol=5e-2, rtol=5e-2), (
        float(jnp.max(jnp.abs(out - ref_f32))))
    print("KERNEL_OK")
</pallas_src>

<mosaic_0001>
module attributes {stable_mosaic.version = 11 : i64} {
  func.func @classifier_kernel(%arg0: i32, %arg1: memref<128x32xf32, #tpu.memory_space<vmem>>, %arg2: memref<64x32xbf16, #tpu.memory_space<vmem>>, %arg3: memref<64x1xf32, #tpu.memory_space<vmem>>, %arg4: memref<64x64xbf16, #tpu.memory_space<vmem>>, %arg5: memref<64x1xf32, #tpu.memory_space<vmem>>, %arg6: memref<32x64xbf16, #tpu.memory_space<vmem>>, %arg7: memref<32x1xf32, #tpu.memory_space<vmem>>, %arg8: memref<32x1xf32, #tpu.memory_space<vmem>>, %arg9: memref<1x1xf32, #tpu.memory_space<vmem>>, %arg10: memref<1x1x128xf32, #tpu.memory_space<vmem>>) attributes {dimension_semantics = [#tpu.dimension_semantics<parallel>], iteration_bounds = array<i64: 2>, scalar_prefetch = 0 : i64, scratch_operands = 0 : i64, tpu.core_type = #tpu.core_type<tc>, window_params = [{transform_indices = @transform_0, window_bounds = array<i64: 128, 32>}, {pipeline_mode = #tpu.pipeline_mode<synchronous>, transform_indices = @transform_1, window_bounds = array<i64: 64, 32>}, {pipeline_mode = #tpu.pipeline_mode<synchronous>, transform_indices = @transform_2, window_bounds = array<i64: 64, 1>}, {pipeline_mode = #tpu.pipeline_mode<synchronous>, transform_indices = @transform_3, window_bounds = array<i64: 64, 64>}, {pipeline_mode = #tpu.pipeline_mode<synchronous>, transform_indices = @transform_4, window_bounds = array<i64: 64, 1>}, {pipeline_mode = #tpu.pipeline_mode<synchronous>, transform_indices = @transform_5, window_bounds = array<i64: 32, 64>}, {pipeline_mode = #tpu.pipeline_mode<synchronous>, transform_indices = @transform_6, window_bounds = array<i64: 32, 1>}, {pipeline_mode = #tpu.pipeline_mode<synchronous>, transform_indices = @transform_7, window_bounds = array<i64: 32, 1>}, {pipeline_mode = #tpu.pipeline_mode<synchronous>, transform_indices = @transform_8, window_bounds = array<i64: 1, 1>}, {transform_indices = @transform_9, window_bounds = array<i64: 1, 1, 128>}]} {
    %c0 = arith.constant 0 : index
    %c0_0 = arith.constant 0 : index
    %0 = vector.load %arg2[%c0, %c0_0] : memref<64x32xbf16, #tpu.memory_space<vmem>>, vector<64x32xbf16>
    %c0_1 = arith.constant 0 : index
    %c0_2 = arith.constant 0 : index
    %1 = vector.load %arg1[%c0_1, %c0_2] : memref<128x32xf32, #tpu.memory_space<vmem>>, vector<128x32xf32>
    %2 = arith.truncf %1 : vector<128x32xf32> to vector<128x32xbf16>
    %cst = arith.constant dense<0.000000e+00> : vector<64x128xf32>
    %3 = tpu.matmul %0, %2, %cst {dimension_numbers = #tpu.dot_dimension_numbers<[1], [1], [0], [0], [0, 0, 1, 0], [], []>} : vector<64x32xbf16>, vector<128x32xbf16>, vector<64x128xf32> -> vector<64x128xf32>
    %c0_3 = arith.constant 0 : index
    %c0_4 = arith.constant 0 : index
    %4 = vector.load %arg3[%c0_3, %c0_4] : memref<64x1xf32, #tpu.memory_space<vmem>>, vector<64x1xf32>
    %5 = vector.broadcast %4 : vector<64x1xf32> to vector<64x128xf32>
    %6 = arith.addf %3, %5 : vector<64x128xf32>
    %cst_5 = arith.constant 0.000000e+00 : f32
    %7 = vector.broadcast %cst_5 : f32 to vector<64x128xf32>
    %8 = arith.cmpf ogt, %6, %7 : vector<64x128xf32>
    %cst_6 = arith.constant 0.000000e+00 : f32
    %9 = vector.broadcast %cst_6 : f32 to vector<64x128xf32>
    %10 = arith.minimumf %6, %9 : vector<64x128xf32>
    %11 = math.exp %10 : vector<64x128xf32>
    %cst_7 = arith.constant 1.000000e+00 : f32
    %12 = vector.broadcast %cst_7 : f32 to vector<64x128xf32>
    %13 = arith.subf %11, %12 : vector<64x128xf32>
    %14 = arith.select %8, %6, %13 : vector<64x128xi1>, vector<64x128xf32>
    %c0_8 = arith.constant 0 : index
    %c0_9 = arith.constant 0 : index
    %15 = vector.load %arg4[%c0_8, %c0_9] : memref<64x64xbf16, #tpu.memory_space<vmem>>, vector<64x64xbf16>
    %16 = arith.truncf %14 : vector<64x128xf32> to vector<64x128xbf16>
    %cst_10 = arith.constant dense<0.000000e+00> : vector<64x128xf32>
    %17 = tpu.matmul %15, %16, %cst_10 {dimension_numbers = #tpu.dot_dimension_numbers<[1], [0], [0], [1], [0, 0, 1, 1], [], []>} : vector<64x64xbf16>, vector<64x128xbf16>, vector<64x128xf32> -> vector<64x128xf32>
    %c0_11 = arith.constant 0 : index
    %c0_12 = arith.constant 0 : index
    %18 = vector.load %arg5[%c0_11, %c0_12] : memref<64x1xf32, #tpu.memory_space<vmem>>, vector<64x1xf32>
    %19 = vector.broadcast %18 : vector<64x1xf32> to vector<64x128xf32>
    %20 = arith.addf %17, %19 : vector<64x128xf32>
    %cst_13 = arith.constant 0.000000e+00 : f32
    %21 = vector.broadcast %cst_13 : f32 to vector<64x128xf32>
    %22 = arith.cmpf ogt, %20, %21 : vector<64x128xf32>
    %cst_14 = arith.constant 0.000000e+00 : f32
    %23 = vector.broadcast %cst_14 : f32 to vector<64x128xf32>
    %24 = arith.minimumf %20, %23 : vector<64x128xf32>
    %25 = math.exp %24 : vector<64x128xf32>
    %cst_15 = arith.constant 1.000000e+00 : f32
    %26 = vector.broadcast %cst_15 : f32 to vector<64x128xf32>
    %27 = arith.subf %25, %26 : vector<64x128xf32>
    %28 = arith.select %22, %20, %27 : vector<64x128xi1>, vector<64x128xf32>
    %c0_16 = arith.constant 0 : index
    %c0_17 = arith.constant 0 : index
    %29 = vector.load %arg6[%c0_16, %c0_17] : memref<32x64xbf16, #tpu.memory_space<vmem>>, vector<32x64xbf16>
    %30 = arith.truncf %28 : vector<64x128xf32> to vector<64x128xbf16>
    %cst_18 = arith.constant dense<0.000000e+00> : vector<32x128xf32>
    %31 = tpu.matmul %29, %30, %cst_18 {dimension_numbers = #tpu.dot_dimension_numbers<[1], [0], [0], [1], [0, 0, 1, 1], [], []>} : vector<32x64xbf16>, vector<64x128xbf16>, vector<32x128xf32> -> vector<32x128xf32>
    %c0_19 = arith.constant 0 : index
    %c0_20 = arith.constant 0 : index
    %32 = vector.load %arg7[%c0_19, %c0_20] : memref<32x1xf32, #tpu.memory_space<vmem>>, vector<32x1xf32>
    %33 = vector.broadcast %32 : vector<32x1xf32> to vector<32x128xf32>
    %34 = arith.addf %31, %33 : vector<32x128xf32>
    %cst_21 = arith.constant 0.000000e+00 : f32
    %35 = vector.broadcast %cst_21 : f32 to vector<32x128xf32>
    %36 = arith.maximumf %34, %35 : vector<32x128xf32>
    %c0_22 = arith.constant 0 : index
    %c0_23 = arith.constant 0 : index
    %37 = vector.load %arg8[%c0_22, %c0_23] : memref<32x1xf32, #tpu.memory_space<vmem>>, vector<32x1xf32>
    %38 = vector.broadcast %37 : vector<32x1xf32> to vector<32x128xf32>
    %39 = arith.mulf %36, %38 : vector<32x128xf32>
    %cst_24 = arith.constant dense<0.000000e+00> : vector<128xf32>
    %40 = vector.multi_reduction <add>, %39, %cst_24 [0] : vector<32x128xf32> to vector<128xf32>
    %41 = vector.shape_cast %40 : vector<128xf32> to vector<1x128xf32>
    %c0_25 = arith.constant 0 : index
    %c0_26 = arith.constant 0 : index
    %42 = vector.load %arg9[%c0_25, %c0_26] : memref<1x1xf32, #tpu.memory_space<vmem>>, vector<1x1xf32>
    %43 = vector.broadcast %42 : vector<1x1xf32> to vector<1x128xf32>
    %44 = arith.addf %41, %43 : vector<1x128xf32>
    %cst_27 = arith.constant 5.000000e-01 : f32
    %45 = vector.broadcast %cst_27 : f32 to vector<1x128xf32>
    %46 = arith.mulf %45, %44 : vector<1x128xf32>
    %47 = math.tanh %46 : vector<1x128xf32>
    %cst_28 = arith.constant 1.000000e+00 : f32
    %48 = vector.broadcast %cst_28 : f32 to vector<1x128xf32>
    %49 = arith.addf %47, %48 : vector<1x128xf32>
    %cst_29 = arith.constant 5.000000e-01 : f32
    %50 = vector.broadcast %cst_29 : f32 to vector<1x128xf32>
    %51 = arith.mulf %50, %49 : vector<1x128xf32>
    %52 = vector.shape_cast %51 : vector<1x128xf32> to vector<1x1x128xf32>
    %c0_30 = arith.constant 0 : index
    %c0_31 = arith.constant 0 : index
    %c0_32 = arith.constant 0 : index
    %53 = vector.load %arg10[%c0_30, %c0_31, %c0_32] : memref<1x1x128xf32, #tpu.memory_space<vmem>>, vector<1x1x128xf32>
    tpu.vector_store %arg10[%c0_30, %c0_31, %c0_32], %52 {strides = array<i32>} : memref<1x1x128xf32, #tpu.memory_space<vmem>>, vector<1x1x128xf32>,
    return
  }
  func.func @transform_0(%arg0: i32) -> (i32, i32) {
    %c0_i32 = arith.constant 0 : i32
    %c0_i32_0 = arith.constant 0 : i32
    return %arg0, %c0_i32 : i32, i32
  }
  func.func @transform_1(%arg0: i32) -> (i32, i32) {
    %c0_i32 = arith.constant 0 : i32
    %c0_i32_0 = arith.constant 0 : i32
    %c0_i32_1 = arith.constant 0 : i32
    return %c0_i32, %c0_i32_0 : i32, i32
  }
  func.func @transform_2(%arg0: i32) -> (i32, i32) {
    %c0_i32 = arith.constant 0 : i32
    %c0_i32_0 = arith.constant 0 : i32
    %c0_i32_1 = arith.constant 0 : i32
    return %c0_i32, %c0_i32_0 : i32, i32
  }
  func.func @transform_3(%arg0: i32) -> (i32, i32) {
    %c0_i32 = arith.constant 0 : i32
    %c0_i32_0 = arith.constant 0 : i32
    %c0_i32_1 = arith.constant 0 : i32
    return %c0_i32, %c0_i32_0 : i32, i32
  }
  func.func @transform_4(%arg0: i32) -> (i32, i32) {
    %c0_i32 = arith.constant 0 : i32
    %c0_i32_0 = arith.constant 0 : i32
    %c0_i32_1 = arith.constant 0 : i32
    return %c0_i32, %c0_i32_0 : i32, i32
  }
  func.func @transform_5(%arg0: i32) -> (i32, i32) {
    %c0_i32 = arith.constant 0 : i32
    %c0_i32_0 = arith.constant 0 : i32
    %c0_i32_1 = arith.constant 0 : i32
    return %c0_i32, %c0_i32_0 : i32, i32
  }
  func.func @transform_6(%arg0: i32) -> (i32, i32) {
    %c0_i32 = arith.constant 0 : i32
    %c0_i32_0 = arith.constant 0 : i32
    %c0_i32_1 = arith.constant 0 : i32
    return %c0_i32, %c0_i32_0 : i32, i32
  }
  func.func @transform_7(%arg0: i32) -> (i32, i32) {
    %c0_i32 = arith.constant 0 : i32
    %c0_i32_0 = arith.constant 0 : i32
    %c0_i32_1 = arith.constant 0 : i32
    return %c0_i32, %c0_i32_0 : i32, i32
  }
  func.func @transform_8(%arg0: i32) -> (i32, i32) {
    %c0_i32 = arith.constant 0 : i32
    %c0_i32_0 = arith.constant 0 : i32
    %c0_i32_1 = arith.constant 0 : i32
    return %c0_i32, %c0_i32_0 : i32, i32
  }
  func.func @transform_9(%arg0: i32) -> (i32, i32, i32) {
    %c0_i32 = arith.constant 0 : i32
    %c0_i32_0 = arith.constant 0 : i32
    %c0_i32_1 = arith.constant 0 : i32
    return %arg0, %c0_i32, %c0_i32_0 : i32, i32, i32
  }
}

</mosaic_0001>

<llo_original>
// kernel: tpu_custom_call.1
$region0: #{tpu_custom_call.1}
  #allocation0 [shape = 'u32[]', space=smem, size = 0x4, offset = 0x4, fixed_abs, tag = 'smem constant byte address 0x4 - core index']
  #allocation1 [shape = 'u32[144,128]{1,0:T(1,128)}', space=vmem, size = 0x12000, scoped, tag = 'internal scratch']
  #allocation2 [shape = 'f32[1,1]{1,0:T(1,128)S(1)}', space=vmem, size = 0x200, scoped, tag = 'scoped memory for tpu_custom_call.1']
  %s0 = inlined_call_operand.vmem [shape: f32[256,32], index: 0, kind: input, shape index: {}]
  %s1 = inlined_call_operand.vmem [shape: bf16[64,32], index: 1, kind: input, shape index: {}]
  %s2 = inlined_call_operand.vmem [shape: f32[64,1], index: 2, kind: input, shape index: {}]
  %s3 = inlined_call_operand.vmem [shape: bf16[64,64], index: 3, kind: input, shape index: {}]
  %s4 = inlined_call_operand.vmem [shape: f32[64,1], index: 4, kind: input, shape index: {}]
  %s5 = inlined_call_operand.vmem [shape: bf16[32,64], index: 5, kind: input, shape index: {}]
  %s6 = inlined_call_operand.vmem [shape: f32[32,1], index: 6, kind: input, shape index: {}]
  %s7 = inlined_call_operand.vmem [shape: f32[32,1], index: 7, kind: input, shape index: {}]
  %s8 = inlined_call_operand.<no memory space> [shape: f32[1,1], index: 8, kind: input, shape index: {}]
  %s9 = inlined_call_operand.hbm [shape: f32[2,1,128], index: 9, kind: output, shape index: {}]
  %s10 = sld [smem:[#allocation0]]
  $region69: #{tpu_custom_call.1} parent=0
    _
  %s12 = ssub.s32 1, %s10
  %s13 = scalar_select 0, %s12, %s10
  %v14 = vstv %s8
  %15 = vst [vmem:[#allocation2] sm:$0x1] %v14
  $region1: #{tpu_custom_call.1} parent=0
    #allocation3 [shape = 'u8[1024]{0}', space=vmem, size = 0x400, scoped, tag = 'output window, operand 0']
    #allocation4 [shape = 's32[2]{0}', space=sflag, size = 0x8, scoped, tag = 'scoped memory for tpu_custom_call.1']
    %16 = vsyncpa [#allocation4], 0
    %s17 = scalar_lea.sflag [#allocation4], 1
    %18 = vsyncpa %s17, 0
    loop: start=0, step=1, limit=4
    $region2: #{tpu_custom_call.1} parent=1 // loop_pre_header
      _
    $region3: #{tpu_custom_call.1} parent=1 // loop_header
      %s20 = sphi 0, %s24
      %p21 = scmp.ge.s32.totalorder %s20, 4
      %s30 = sphi 0, %s32
      %s33 = sphi 0, %s30
      %s34 = sphi 0, %s33
      %s50 = sphi 0, %s34
      %s54 = sphi 0, %s54
      %s56 = sphi 0, %s54
      %s57 = sphi 0, %s56
      %s71 = sphi 0, %s57
      %s75 = sphi 0, %s75
      %s77 = sphi 0, %s75
      %s78 = sphi 0, %s77
      %s92 = sphi 0, %s78
      %s96 = sphi 0, %s96
      %s98 = sphi 0, %s96
      %s99 = sphi 0, %s98
      %s113 = sphi 0, %s99
      %s117 = sphi 0, %s117
      %s119 = sphi 0, %s117
      %s120 = sphi 0, %s119
      %s134 = sphi 0, %s120
      %s138 = sphi 0, %s138
      %s140 = sphi 0, %s138
      %s141 = sphi 0, %s140
      %s155 = sphi 0, %s141
      %s159 = sphi 0, %s159
      %s161 = sphi 0, %s159
      %s162 = sphi 0, %s161
      %s176 = sphi 0, %s162
      %s180 = sphi 0, %s180
      %s182 = sphi 0, %s180
      %s183 = sphi 0, %s182
      %s197 = sphi 0, %s183
      %s201 = sphi 0, %s201
      %s203 = sphi 0, %s201
      %s204 = sphi 0, %s203
      %s218 = sphi 0, %s204
      %s224 = sphi 0, %s226
      %s227 = sphi 0, %s224
      %s228 = sphi 0, %s227
      %s244 = sphi 0, %s228
    $region4: #{tpu_custom_call.1} parent=1 // loop_header_branch
      %23 = sbr.rel (%p21) target = $region8
    $region5: #{tpu_custom_call.1} parent=1 // loop_body
      %s25 = ssub.s32 %s20, 1
      %s26 = ssub.s32 %s20, 2
      %s27 = sadd.s32 %s20, 1
      %s28 = ssub.s32 %s20, %s27
      %p29 = scmp.eq.s32.totalorder %s28, 0
      %s31 = sadd.s32 %s30, 1
      %s32 = scalar_select %p29, %s30, %s31
      %p35 = pneg %p29
      %p36 = scmp.eq.s32.totalorder %s20, 1
      %p37 = por %p35, %p36
      %p38 = scmp.ne.s32.totalorder %s30, %s33
      %p39 = scmp.eq.s32.totalorder %s20, 0
      %p40 = por %p38, %p39
      %p41 = scmp.ne.s32.totalorder %s30, %s33
      %p42 = scmp.eq.s32.totalorder %s25, 1
      %p43 = por %p41, %p42
      %p44 = scmp.ne.s32.totalorder %s33, %s34
      %p45 = scmp.eq.s32.totalorder %s25, 0
      %p46 = por %p44, %p45
      %p47 = scmp.ne.s32.totalorder %s33, %s34
      %p48 = scmp.eq.s32.totalorder %s26, 1
      %p49 = por %p47, %p48
      %p51 = scmp.ne.s32.totalorder %s34, %s50
      %p52 = scmp.eq.s32.totalorder %s26, 0
      %p53 = por %p51, %p52
      %s55 = sadd.s32 %s54, 1
      %p58 = scmp.eq.s32.totalorder %s20, 1
      %p59 = scmp.ne.s32.totalorder %s54, %s56
      %p60 = scmp.eq.s32.totalorder %s20, 0
      %p61 = por %p59, %p60
      %p62 = scmp.ne.s32.totalorder %s54, %s56
      %p63 = scmp.eq.s32.totalorder %s25, 1
      %p64 = por %p62, %p63
      %p65 = scmp.ne.s32.totalorder %s56, %s57
      %p66 = scmp.eq.s32.totalorder %s25, 0
      %p67 = por %p65, %p66
      %p68 = scmp.ne.s32.totalorder %s56, %s57
      %p69 = scmp.eq.s32.totalorder %s26, 1
      %p70 = por %p68, %p69
      %p72 = scmp.ne.s32.totalorder %s57, %s71
      %p73 = scmp.eq.s32.totalorder %s26, 0
      %p74 = por %p72, %p73
      %s76 = sadd.s32 %s75, 1
      %p79 = scmp.eq.s32.totalorder %s20, 1
      %p80 = scmp.ne.s32.totalorder %s75, %s77
      %p81 = scmp.eq.s32.totalorder %s20, 0
      %p82 = por %p80, %p81
      %p83 = scmp.ne.s32.totalorder %s75, %s77
      %p84 = scmp.eq.s32.totalorder %s25, 1
      %p85 = por %p83, %p84
      %p86 = scmp.ne.s32.totalorder %s77, %s78
      %p87 = scmp.eq.s32.totalorder %s25, 0
      %p88 = por %p86, %p87
      %p89 = scmp.ne.s32.totalorder %s77, %s78
      %p90 = scmp.eq.s32.totalorder %s26, 1
      %p91 = por %p89, %p90
      %p93 = scmp.ne.s32.totalorder %s78, %s92
      %p94 = scmp.eq.s32.totalorder %s26, 0
      %p95 = por %p93, %p94
      %s97 = sadd.s32 %s96, 1
      %p100 = scmp.eq.s32.totalorder %s20, 1
      %p101 = scmp.ne.s32.totalorder %s96, %s98
      %p102 = scmp.eq.s32.totalorder %s20, 0
      %p103 = por %p101, %p102
      %p104 = scmp.ne.s32.totalorder %s96, %s98
      %p105 = scmp.eq.s32.totalorder %s25, 1
      %p106 = por %p104, %p105
      %p107 = scmp.ne.s32.totalorder %s98, %s99
      %p108 = scmp.eq.s32.totalorder %s25, 0
      %p109 = por %p107, %p108
      %p110 = scmp.ne.s32.totalorder %s98, %s99
      %p111 = scmp.eq.s32.totalorder %s26, 1
      %p112 = por %p110, %p111
      %p114 = scmp.ne.s32.totalorder %s99, %s113
      %p115 = scmp.eq.s32.totalorder %s26, 0
      %p116 = por %p114, %p115
      %s118 = sadd.s32 %s117, 1
      %p121 = scmp.eq.s32.totalorder %s20, 1
      %p122 = scmp.ne.s32.totalorder %s117, %s119
      %p123 = scmp.eq.s32.totalorder %s20, 0
      %p124 = por %p122, %p123
      %p125 = scmp.ne.s32.totalorder %s117, %s119
      %p126 = scmp.eq.s32.totalorder %s25, 1
      %p127 = por %p125, %p126
      %p128 = scmp.ne.s32.totalorder %s119, %s120
      %p129 = scmp.eq.s32.totalorder %s25, 0
      %p130 = por %p128, %p129
      %p131 = scmp.ne.s32.totalorder %s119, %s120
      %p132 = scmp.eq.s32.totalorder %s26, 1
      %p133 = por %p131, %p132
      %p135 = scmp.ne.s32.totalorder %s120, %s134
      %p136 = scmp.eq.s32.totalorder %s26, 0
      %p137 = por %p135, %p136
      %s139 = sadd.s32 %s138, 1
      %p142 = scmp.eq.s32.totalorder %s20, 1
      %p143 = scmp.ne.s32.totalorder %s138, %s140
      %p144 = scmp.eq.s32.totalorder %s20, 0
      %p145 = por %p143, %p144
      %p146 = scmp.ne.s32.totalorder %s138, %s140
      %p147 = scmp.eq.s32.totalorder %s25, 1
      %p148 = por %p146, %p147
      %p149 = scmp.ne.s32.totalorder %s140, %s141
      %p150 = scmp.eq.s32.totalorder %s25, 0
      %p151 = por %p149, %p150
      %p152 = scmp.ne.s32.totalorder %s140, %s141
      %p153 = scmp.eq.s32.totalorder %s26, 1
      %p154 = por %p152, %p153
      %p156 = scmp.ne.s32.totalorder %s141, %s155
      %p157 = scmp.eq.s32.totalorder %s26, 0
      %p158 = por %p156, %p157
      %s160 = sadd.s32 %s159, 1
      %p163 = scmp.eq.s32.totalorder %s20, 1
      %p164 = scmp.ne.s32.totalorder %s159, %s161
      %p165 = scmp.eq.s32.totalorder %s20, 0
      %p166 = por %p164, %p165
      %p167 = scmp.ne.s32.totalorder %s159, %s161
      %p168 = scmp.eq.s32.totalorder %s25, 1
      %p169 = por %p167, %p168
      %p170 = scmp.ne.s32.totalorder %s161, %s162
      %p171 = scmp.eq.s32.totalorder %s25, 0
      %p172 = por %p170, %p171
      %p173 = scmp.ne.s32.totalorder %s161, %s162
      %p174 = scmp.eq.s32.totalorder %s26, 1
      %p175 = por %p173, %p174
      %p177 = scmp.ne.s32.totalorder %s162, %s176
      %p178 = scmp.eq.s32.totalorder %s26, 0
      %p179 = por %p177, %p178
      %s181 = sadd.s32 %s180, 1
      %p184 = scmp.eq.s32.totalorder %s20, 1
      %p185 = scmp.ne.s32.totalorder %s180, %s182
      %p186 = scmp.eq.s32.totalorder %s20, 0
      %p187 = por %p185, %p186
      %p188 = scmp.ne.s32.totalorder %s180, %s182
      %p189 = scmp.eq.s32.totalorder %s25, 1
      %p190 = por %p188, %p189
      %p191 = scmp.ne.s32.totalorder %s182, %s183
      %p192 = scmp.eq.s32.totalorder %s25, 0
      %p193 = por %p191, %p192
      %p194 = scmp.ne.s32.totalorder %s182, %s183
      %p195 = scmp.eq.s32.totalorder %s26, 1
      %p196 = por %p194, %p195
      %p198 = scmp.ne.s32.totalorder %s183, %s197
      %p199 = scmp.eq.s32.totalorder %s26, 0
      %p200 = por %p198, %p199
      %s202 = sadd.s32 %s201, 1
      %p205 = scmp.eq.s32.totalorder %s20, 1
      %p206 = scmp.ne.s32.totalorder %s201, %s203
      %p207 = scmp.eq.s32.totalorder %s20, 0
      %p208 = por %p206, %p207
      %p209 = scmp.ne.s32.totalorder %s201, %s203
      %p210 = scmp.eq.s32.totalorder %s25, 1
      %p211 = por %p209, %p210
      %p212 = scmp.ne.s32.totalorder %s203, %s204
      %p213 = scmp.eq.s32.totalorder %s25, 0
      %p214 = por %p212, %p213
      %p215 = scmp.ne.s32.totalorder %s203, %s204
      %p216 = scmp.eq.s32.totalorder %s26, 1
      %p217 = por %p215, %p216
      %p219 = scmp.ne.s32.totalorder %s204, %s218
      %p220 = scmp.eq.s32.totalorder %s26, 0
      %p221 = por %p219, %p220
      %s222 = ssub.s32 %s20, %s27
      %p223 = scmp.eq.s32.totalorder %s222, 0
      %s225 = sadd.s32 %s224, 1
      %s226 = scalar_select %p223, %s224, %s225
      %p229 = pneg %p223
      %p230 = scmp.eq.s32.totalorder %s20, 1
      %p231 = por %p229, %p230
      %p232 = scmp.ne.s32.totalorder %s224, %s227
      %p233 = scmp.eq.s32.totalorder %s20, 0
      %p234 = por %p232, %p233
      %p235 = scmp.ne.s32.totalorder %s224, %s227
      %p236 = scmp.eq.s32.totalorder %s25, 1
      %p237 = por %p235, %p236
      %p238 = scmp.ne.s32.totalorder %s227, %s228
      %p239 = scmp.eq.s32.totalorder %s25, 0
      %p240 = por %p238, %p239
      %p241 = scmp.ne.s32.totalorder %s227, %s228
      %p242 = scmp.eq.s32.totalorder %s26, 1
      %p243 = por %p241, %p242
      %p245 = scmp.ne.s32.totalorder %s228, %s244
      %p246 = scmp.eq.s32.totalorder %s26, 0
      %p247 = por %p245, %p246
      %p248 = scmp.le.s32.totalorder 1, %s20
      %p249 = scmp.lt.s32.totalorder %s20, 3
      %p250 = pnand %p248, %p249
      %p251 = pneg %p250
      // Predicated region
      $region9: #{tpu_custom_call.1} parent=5 // pred_check
        _
      $region10: #{tpu_custom_call.1} parent=5 // pred_check_branch
        %253 = sbr.rel (%p250) target = $region12
      $region11: #{tpu_custom_call.1} parent=5 // pred_region
        %s254 = ssub.s32 %s20, 1
        // Predicated region
        $region13: #{tpu_custom_call.1} parent=11 // pred_check
          %p255 = pneg %p67
        $region14: #{tpu_custom_call.1} parent=11 // pred_check_branch
          %257 = sbr.rel (%p255) target = $region16
        $region15: #{tpu_custom_call.1} parent=11 // pred_region
          _
        $region16: #{tpu_custom_call.1} parent=11 // pred_fallthru
          _
        // Predicated region
        $region17: #{tpu_custom_call.1} parent=11 // pred_check
          %p258 = pneg %p88
        $region18: #{tpu_custom_call.1} parent=11 // pred_check_branch
          %260 = sbr.rel (%p258) target = $region20
        $region19: #{tpu_custom_call.1} parent=11 // pred_region
          _
        $region20: #{tpu_custom_call.1} parent=11 // pred_fallthru
          _
        // Predicated region
        $region21: #{tpu_custom_call.1} parent=11 // pred_check
          %p261 = pneg %p109
        $region22: #{tpu_custom_call.1} parent=11 // pred_check_branch
          %263 = sbr.rel (%p261) target = $region24
        $region23: #{tpu_custom_call.1} parent=11 // pred_region
          _
        $region24: #{tpu_custom_call.1} parent=11 // pred_fallthru
          _
        // Predicated region
        $region25: #{tpu_custom_call.1} parent=11 // pred_check
          %p264 = pneg %p130
        $region26: #{tpu_custom_call.1} parent=11 // pred_check_branch
          %266 = sbr.rel (%p264) target = $region28
        $region27: #{tpu_custom_call.1} parent=11 // pred_region
          _
        $region28: #{tpu_custom_call.1} parent=11 // pred_fallthru
          _
        // Predicated region
        $region29: #{tpu_custom_call.1} parent=11 // pred_check
          %p267 = pneg %p151
        $region30: #{tpu_custom_call.1} parent=11 // pred_check_branch
          %269 = sbr.rel (%p267) target = $region32
        $region31: #{tpu_custom_call.1} parent=11 // pred_region
          _
        $region32: #{tpu_custom_call.1} parent=11 // pred_fallthru
          _
        // Predicated region
        $region33: #{tpu_custom_call.1} parent=11 // pred_check
          %p270 = pneg %p172
        $region34: #{tpu_custom_call.1} parent=11 // pred_check_branch
          %272 = sbr.rel (%p270) target = $region36
        $region35: #{tpu_custom_call.1} parent=11 // pred_region
          _
        $region36: #{tpu_custom_call.1} parent=11 // pred_fallthru
          _
        // Predicated region
        $region37: #{tpu_custom_call.1} parent=11 // pred_check
          %p273 = pneg %p193
        $region38: #{tpu_custom_call.1} parent=11 // pred_check_branch
          %275 = sbr.rel (%p273) target = $region40
        $region39: #{tpu_custom_call.1} parent=11 // pred_region
          _
        $region40: #{tpu_custom_call.1} parent=11 // pred_fallthru
          _
        // Predicated region
        $region41: #{tpu_custom_call.1} parent=11 // pred_check
          %p276 = pneg %p214
        $region42: #{tpu_custom_call.1} parent=11 // pred_check_branch
          %278 = sbr.rel (%p276) target = $region44
        $region43: #{tpu_custom_call.1} parent=11 // pred_region
          _
        $region44: #{tpu_custom_call.1} parent=11 // pred_fallthru
          _
      $region12: #{tpu_custom_call.1} parent=5 // pred_fallthru
        _
      %p279 = scmp.lt.s32.totalorder %s20, 2
      // Predicated region
      $region45: #{tpu_custom_call.1} parent=5 // pred_check
        %p280 = pneg %p279
      $region46: #{tpu_custom_call.1} parent=5 // pred_check_branch
        %282 = sbr.rel (%p280) target = $region48
      $region47: #{tpu_custom_call.1} parent=5 // pred_region
        // Predicated region
        $region49: #{tpu_custom_call.1} parent=47 // pred_check
          %p283 = pneg %p40
        $region50: #{tpu_custom_call.1} parent=47 // pred_check_branch
          %285 = sbr.rel (%p283) target = $region52
        $region51: #{tpu_custom_call.1} parent=47 // pred_region
          %s286 = smul.u32 16, %s20
          %p287 = scmp.lt.s32.totalorder %s286, 31
          %s288 = scalar_select %p287, %s286, 31
          %s289 = smul.addr %s288, 8
          %s290 = scalar_lea.vmem %s0, %s289
          %s291 = smul.u32 16, %s20
        $region52: #{tpu_custom_call.1} parent=47 // pred_fallthru
          _
      $region48: #{tpu_custom_call.1} parent=5 // pred_fallthru
        _
      %p292 = scmp.le.s32.totalorder 1, %s20
      %p293 = scmp.lt.s32.totalorder %s20, 3
      %p294 = pnand %p292, %p293
      %p295 = pneg %p294
      // Predicated region
      $region53: #{tpu_custom_call.1} parent=5 // pred_check
        _
      $region54: #{tpu_custom_call.1} parent=5 // pred_check_branch
        %297 = sbr.rel (%p294) target = $region56
      $region55: #{tpu_custom_call.1} parent=5 // pred_region
        %s298 = ssub.s32 %s20, 1
        %s299 = smul.u32 16, %s25
        %p300 = scmp.lt.s32.totalorder %s299, 31
        %s301 = scalar_select %p300, %s299, 31
        %s302 = smul.addr %s301, 8
        %s303 = scalar_lea.vmem %s0, %s302
        %p304 = pneg %p46
        %p305 = pneg %p43
        %p306 = pneg %p67
        %p307 = pneg %p64
        %p308 = pneg %p88
        %p309 = pneg %p85
        %p310 = pneg %p109
        %p311 = pneg %p106
        %p312 = pneg %p130
        %p313 = pneg %p127
        %p314 = pneg %p151
        %p315 = pneg %p148
        %p316 = pneg %p172
        %p317 = pneg %p169
        %p318 = pneg %p193
        %p319 = pneg %p190
        %p320 = pneg %p214
        %p321 = pneg %p211
        %p322 = pneg %p240
        %p323 = pneg %p237
        %s324 = sand.u32 %s227, 1
        %s325 = scalar_lea.sflag [#allocation4], %s324
        %s326 = sand.u32 %s227, 1
        %s327 = scalar_lea.vmem [#allocation3], %s326
        %s328 = smul.u32 16, %s25
        %p329 = scmp.lt.s32.totalorder %s328, 31
        %s330 = scalar_select %p329, %s328, 31
        %s331 = smul.addr %s330, 8
        %s332 = scalar_lea.vmem %s0, %s331
        %s333 = smul.u32 16, %s25
        %v335 = vld [vmem:[%s1] sm:$0xf]
        %v336 = vld [vmem:[%s1 + $0x4] sm:$0xf]
        %v337 = vld [vmem:[%s1 + $0x8] sm:$0xf]
        %v338 = vld [vmem:[%s1 + $0xc] sm:$0xf]
        %v339 = vld [vmem:[%s1 + $0x10] sm:$0xf]
        %v340 = vld [vmem:[%s1 + $0x14] sm:$0xf]
        %v341 = vld [vmem:[%s1 + $0x18] sm:$0xf]
        %v342 = vld [vmem:[%s1 + $0x1c] sm:$0xf]
        %v343 = vld [vmem:[%s332] sm:$0xff]
        %v344 = vld [vmem:[%s332 + $0x8] sm:$0xff]
        %v345 = vld [vmem:[%s332 + $0x10] sm:$0xff]
        %v346 = vld [vmem:[%s332 + $0x18] sm:$0xff]
        %v347 = vld [vmem:[%s332 + $0x20] sm:$0xff]
        %v348 = vld [vmem:[%s332 + $0x28] sm:$0xff]
        %v349 = vld [vmem:[%s332 + $0x30] sm:$0xff]
        %v350 = vld [vmem:[%s332 + $0x38] sm:$0xff]
        %v351 = vld [vmem:[%s332 + $0x40] sm:$0xff]
        %v352 = vld [vmem:[%s332 + $0x48] sm:$0xff]
        %v353 = vld [vmem:[%s332 + $0x50] sm:$0xff]
        %v354 = vld [vmem:[%s332 + $0x58] sm:$0xff]
        %v355 = vld [vmem:[%s332 + $0x60] sm:$0xff]
        %v356 = vld [vmem:[%s332 + $0x68] sm:$0xff]
        %v357 = vld [vmem:[%s332 + $0x70] sm:$0xff]
        %v358 = vld [vmem:[%s332 + $0x78] sm:$0xff]
        %v359 = vpack.c.bf16 %v344, %v343
        %v360 = vpack.c.bf16 %v346, %v345
        %v361 = vpack.c.bf16 %v348, %v347
        %v362 = vpack.c.bf16 %v350, %v349
        %v363 = vpack.c.bf16 %v352, %v351
        %v364 = vpack.c.bf16 %v354, %v353
        %v365 = vpack.c.bf16 %v356, %v355
        %v366 = vpack.c.bf16 %v358, %v357
        %v367 = vld [vmem:[%s2] sm:$0xff]
        %v368 = vld [vmem:[%s2 + $0x8] sm:$0xff]
        %v369 = vld [vmem:[%s2 + $0x10] sm:$0xff]
        %v370 = vld [vmem:[%s2 + $0x18] sm:$0xff]
        %v371 = vld [vmem:[%s2 + $0x20] sm:$0xff]
        %v372 = vld [vmem:[%s2 + $0x28] sm:$0xff]
        %v373 = vld [vmem:[%s2 + $0x30] sm:$0xff]
        %v374 = vld [vmem:[%s2 + $0x38] sm:$0xff]
        %376 = vset.pattern.permute.xlu0 0
        %377 = vperm.xlu0 %376, %v367
        %v378 = vpop.permute.xlu0 %377
        %381 = vset.pattern.permute.xlu0 0
        %382 = vperm.xlu0 %381, %v368
        %v383 = vpop.permute.xlu0 %382
        %386 = vset.pattern.permute.xlu0 0
        %387 = vperm.xlu0 %386, %v369
        %v388 = vpop.permute.xlu0 %387
        %391 = vset.pattern.permute.xlu0 0
        %392 = vperm.xlu0 %391, %v370
        %v393 = vpop.permute.xlu0 %392
        %396 = vset.pattern.permute.xlu0 0
        %397 = vperm.xlu0 %396, %v371
        %v398 = vpop.permute.xlu0 %397
        %401 = vset.pattern.permute.xlu0 0
        %402 = vperm.xlu0 %401, %v372
        %v403 = vpop.permute.xlu0 %402
        %406 = vset.pattern.permute.xlu0 0
        %407 = vperm.xlu0 %406, %v373
        %v408 = vpop.permute.xlu0 %407
        %411 = vset.pattern.permute.xlu0 0
        %412 = vperm.xlu0 %411, %v374
        %v413 = vpop.permute.xlu0 %412
        %v423 = vunpack.c.l.b16 %v335
        %v424 = vunpack.c.l.b16 %v336
        %v425 = vunpack.c.l.b16 %v337
        %v426 = vunpack.c.l.b16 %v338
        %v427 = vunpack.c.l.b16 %v339
        %v428 = vunpack.c.l.b16 %v340
        %v429 = vunpack.c.l.b16 %v341
        %v430 = vunpack.c.l.b16 %v342
        %v431 = vpack.c.b16 %v424, %v423
        %v432 = vpack.c.b16 %v426, %v425
        %v433 = vpack.c.b16 %v428, %v427
        %v434 = vpack.c.b16 %v430, %v429
        %vm435 = vcmask 261120
        %v437 = vsel %vm435, %v431, 0
        %v440 = vsel %vm435, %v432, 0
        %v443 = vsel %vm435, %v433, 0
        %v446 = vsel %vm435, %v434, 0
        %v449 = vsel %vm435, %v359, 0
        %v452 = vsel %vm435, %v360, 0
        %v455 = vsel %vm435, %v361, 0
        %v458 = vsel %vm435, %v362, 0
        %v461 = vsel %vm435, %v363, 0
        %v464 = vsel %vm435, %v364, 0
        %v467 = vsel %vm435, %v365, 0
        %v470 = vsel %vm435, %v366, 0
        %472 = vmatprep.subr.bf16.mxu0 0
        %473 = vmatpush1.bf16.xpose.msra.mxu0 %v449
        %474 = vmatprep.subr.bf16.mxu0 0
        %475 = vmatpush1.bf16.xpose.msra.mxu0 %v452
        %476 = vmatprep.subr.bf16.mxu0 0
        %477 = vmatpush1.bf16.xpose.msra.mxu0 %v455
        %478 = vmatprep.subr.bf16.mxu0 0
        %479 = vmatpush1.bf16.xpose.msra.mxu0 %v458
        %480 = vmatprep.subr.bf16.mxu0 0
        %481 = vmatpush1.bf16.xpose.msra.mxu0 %v461
        %482 = vmatprep.subr.bf16.mxu0 0
        %483 = vmatpush1.bf16.xpose.msra.mxu0 %v464
        %484 = vmatprep.subr.bf16.mxu0 0
        %485 = vmatpush1.bf16.xpose.msra.mxu0 %v467
        %486 = vmatprep.subr.bf16.mxu0 0
        %487 = vmatpush1.bf16.xpose.msra.mxu0 %v470
        %488 = vmatprep.subr.bf16.mxu0 0
        %489 = vmatpush1.bf16.xpose.msra.mxu0 0
        %490 = vmatprep.subr.bf16.mxu0 0
        %491 = vmatpush1.bf16.xpose.msra.mxu0 0
        %492 = vmatprep.subr.bf16.mxu0 0
        %493 = vmatpush1.bf16.xpose.msra.mxu0 0
        %494 = vmatprep.subr.bf16.mxu0 0
        %495 = vmatpush1.bf16.xpose.msra.mxu0 0
        %496 = vmatprep.subr.bf16.mxu0 0
        %497 = vmatpush1.bf16.xpose.msra.mxu0 0
        %498 = vmatprep.subr.bf16.mxu0 0
        %499 = vmatpush1.bf16.xpose.msra.mxu0 0
        %500 = vmatprep.subr.bf16.mxu0 0
        %501 = vmatpush1.bf16.xpose.msra.mxu0 0
        %502 = vmatprep.subr.bf16.mxu0 0
        %503 = vmatpush1.bf16.xpose.msra.mxu0 0
        %504 = vmatprep.mubr.bf16.mxu0 0
        %505 = vmatmul.mubr.bf16.gmra.mrb[0].mxu0 %v437
        %v506 = vpop.f32.mrb[0].mxu0
        %v507 = vadd.f32 %v378, %v506
        %v508 = vpop.f32.mrb[0].mxu0
        %v509 = vpop.f32.mrb[0].mxu0
        %v510 = vadd.f32 %v383, %v509
        %v511 = vpop.f32.mrb[0].mxu0
        %512 = vmatprep.mubr.bf16.mxu0 0
        %513 = vmatmul.mubr.bf16.gmra.mrb[0].mxu0 %v440
        %v514 = vpop.f32.mrb[0].mxu0
        %v515 = vadd.f32 %v388, %v514
        %v516 = vpop.f32.mrb[0].mxu0
        %v517 = vpop.f32.mrb[0].mxu0
        %v518 = vadd.f32 %v393, %v517
        %v519 = vpop.f32.mrb[0].mxu0
        %520 = vmatprep.mubr.bf16.mxu0 0
        %521 = vmatmul.mubr.bf16.gmra.mrb[0].mxu0 %v443
        %v522 = vpop.f32.mrb[0].mxu0
        %v523 = vadd.f32 %v398, %v522
        %v524 = vpop.f32.mrb[0].mxu0
        %v525 = vpop.f32.mrb[0].mxu0
        %v526 = vadd.f32 %v403, %v525
        %v527 = vpop.f32.mrb[0].mxu0
        %528 = vmatprep.mubr.bf16.mxu0 0
        %529 = vmatmul.mubr.bf16.gmra.mrb[0].mxu0 %v446
        %v530 = vpop.f32.mrb[0].mxu0
        %v531 = vadd.f32 %v408, %v530
        %v532 = vpop.f32.mrb[0].mxu0
        %v533 = vpop.f32.mrb[0].mxu0
        %v534 = vadd.f32 %v413, %v533
        %v535 = vpop.f32.mrb[0].mxu0
        %536 = vdwg.mxu0
        %vm537 = vcmp.gt.f32.partialorder %v507, 0.0
        %vm538 = vcmp.gt.f32.partialorder %v510, 0.0
        %vm539 = vcmp.gt.f32.partialorder %v515, 0.0
        %vm540 = vcmp.gt.f32.partialorder %v518, 0.0
        %vm541 = vcmp.gt.f32.partialorder %v523, 0.0
        %vm542 = vcmp.gt.f32.partialorder %v526, 0.0
        %vm543 = vcmp.gt.f32.partialorder %v531, 0.0
        %vm544 = vcmp.gt.f32.partialorder %v534, 0.0
        %v545 = vmin.f32 %v507, 0.0
        %v546 = vmin.f32 %v510, 0.0
        %v547 = vmin.f32 %v515, 0.0
        %v548 = vmin.f32 %v518, 0.0
        %v549 = vmin.f32 %v523, 0.0
        %v550 = vmin.f32 %v526, 0.0
        %v551 = vmin.f32 %v531, 0.0
        %v552 = vmin.f32 %v534, 0.0
        %v553 = vmul.f32 %v545, 1.442695
        %v554 = vpow.pop %v553
        %v555 = vmul.f32 %v546, 1.442695
        %v556 = vpow.pop %v555
        %v557 = vmul.f32 %v547, 1.442695
        %v558 = vpow.pop %v557
        %v559 = vmul.f32 %v548, 1.442695
        %v560 = vpow.pop %v559
        %v561 = vmul.f32 %v549, 1.442695
        %v562 = vpow.pop %v561
        %v563 = vmul.f32 %v550, 1.442695
        %v564 = vpow.pop %v563
        %v565 = vmul.f32 %v551, 1.442695
        %v566 = vpow.pop %v565
        %v567 = vmul.f32 %v552, 1.442695
        %v568 = vpow.pop %v567
        %v569 = vsub.f32 %v554, 1.0
        %v570 = vsub.f32 %v556, 1.0
        %v571 = vsub.f32 %v558, 1.0
        %v572 = vsub.f32 %v560, 1.0
        %v573 = vsub.f32 %v562, 1.0
        %v574 = vsub.f32 %v564, 1.0
        %v575 = vsub.f32 %v566, 1.0
        %v576 = vsub.f32 %v568, 1.0
        %v577 = vsel %vm537, %v507, %v569
        %v578 = vsel %vm538, %v510, %v570
        %v579 = vsel %vm539, %v515, %v571
        %v580 = vsel %vm540, %v518, %v572
        %v581 = vsel %vm541, %v523, %v573
        %v582 = vsel %vm542, %v526, %v574
        %v583 = vsel %vm543, %v531, %v575
        %v584 = vsel %vm544, %v534, %v576
        %v585 = vld [vmem:[%s3] sm:$0xf]
        %v586 = vld [vmem:[%s3 + $0x4] sm:$0xf]
        %v587 = vld [vmem:[%s3 + $0x8] sm:$0xf]
        %v588 = vld [vmem:[%s3 + $0xc] sm:$0xf]
        %v589 = vld [vmem:[%s3 + $0x10] sm:$0xf]
        %v590 = vld [vmem:[%s3 + $0x14] sm:$0xf]
        %v591 = vld [vmem:[%s3 + $0x18] sm:$0xf]
        %v592 = vld [vmem:[%s3 + $0x1c] sm:$0xf]
        %v593 = vpack.c.bf16 %v578, %v577
        %v594 = vpack.c.bf16 %v580, %v579
        %v595 = vpack.c.bf16 %v582, %v581
        %v596 = vpack.c.bf16 %v584, %v583
        %v597 = vld [vmem:[%s4] sm:$0xff]
        %v598 = vld [vmem:[%s4 + $0x8] sm:$0xff]
        %v599 = vld [vmem:[%s4 + $0x10] sm:$0xff]
        %v600 = vld [vmem:[%s4 + $0x18] sm:$0xff]
        %v601 = vld [vmem:[%s4 + $0x20] sm:$0xff]
        %v602 = vld [vmem:[%s4 + $0x28] sm:$0xff]
        %v603 = vld [vmem:[%s4 + $0x30] sm:$0xff]
        %v604 = vld [vmem:[%s4 + $0x38] sm:$0xff]
        %606 = vset.pattern.permute.xlu0 0
        %607 = vperm.xlu0 %606, %v597
        %v608 = vpop.permute.xlu0 %607
        %611 = vset.pattern.permute.xlu0 0
        %612 = vperm.xlu0 %611, %v598
        %v613 = vpop.permute.xlu0 %612
        %616 = vset.pattern.permute.xlu0 0
        %617 = vperm.xlu0 %616, %v599
        %v618 = vpop.permute.xlu0 %617
        %621 = vset.pattern.permute.xlu0 0
        %622 = vperm.xlu0 %621, %v600
        %v623 = vpop.permute.xlu0 %622
        %626 = vset.pattern.permute.xlu0 0
        %627 = vperm.xlu0 %626, %v601
        %v628 = vpop.permute.xlu0 %627
        %631 = vset.pattern.permute.xlu0 0
        %632 = vperm.xlu0 %631, %v602
        %v633 = vpop.permute.xlu0 %632
        %636 = vset.pattern.permute.xlu0 0
        %637 = vperm.xlu0 %636, %v603
        %v638 = vpop.permute.xlu0 %637
        %641 = vset.pattern.permute.xlu0 0
        %642 = vperm.xlu0 %641, %v604
        %v643 = vpop.permute.xlu0 %642
        %v653 = vunpack.c.l.b16 %v585
        %v654 = vunpack.c.l.b16 %v586
        %v655 = vunpack.c.l.b16 %v587
        %v656 = vunpack.c.l.b16 %v588
        %v657 = vunpack.c.l.b16 %v589
        %v658 = vunpack.c.l.b16 %v590
        %v659 = vunpack.c.l.b16 %v591
        %v660 = vunpack.c.l.b16 %v592
        %v661 = vpack.c.b16 %v654, %v653
        %v662 = vpack.c.b16 %v656, %v655
        %v663 = vpack.c.b16 %v658, %v657
        %v664 = vpack.c.b16 %v660, %v659
        %vm665 = vcmask 523264
        %v667 = vsel %vm665, %v661, 0
        %v670 = vsel %vm665, %v662, 0
        %v673 = vsel %vm665, %v663, 0
        %v676 = vsel %vm665, %v664, 0
        %678 = vmatprep.subr.bf16.mxu0 0
        %679 = vmatpush1.bf16.msra.mxu0 %v593
        %680 = vmatprep.subr.bf16.mxu0 0
        %681 = vmatpush1.bf16.msra.mxu0 %v594
        %682 = vmatprep.subr.bf16.mxu0 0
        %683 = vmatpush1.bf16.msra.mxu0 %v595
        %684 = vmatprep.subr.bf16.mxu0 0
        %685 = vmatpush1.bf16.msra.mxu0 %v596
        %686 = vmatprep.subr.bf16.mxu0 0
        %687 = vmatpush1.bf16.msra.mxu0 0
        %688 = vmatprep.subr.bf16.mxu0 0
        %689 = vmatpush1.bf16.msra.mxu0 0
        %690 = vmatprep.subr.bf16.mxu0 0
        %691 = vmatpush1.bf16.msra.mxu0 0
        %692 = vmatprep.subr.bf16.mxu0 0
        %693 = vmatpush1.bf16.msra.mxu0 0
        %694 = vmatprep.subr.bf16.mxu0 0
        %695 = vmatpush1.bf16.msra.mxu0 0
        %696 = vmatprep.subr.bf16.mxu0 0
        %697 = vmatpush1.bf16.msra.mxu0 0
        %698 = vmatprep.subr.bf16.mxu0 0
        %699 = vmatpush1.bf16.msra.mxu0 0
        %700 = vmatprep.subr.bf16.mxu0 0
        %701 = vmatpush1.bf16.msra.mxu0 0
        %702 = vmatprep.subr.bf16.mxu0 0
        %703 = vmatpush1.bf16.msra.mxu0 0
        %704 = vmatprep.subr.bf16.mxu0 0
        %705 = vmatpush1.bf16.msra.mxu0 0
        %706 = vmatprep.subr.bf16.mxu0 0
        %707 = vmatpush1.bf16.msra.mxu0 0
        %708 = vmatprep.subr.bf16.mxu0 0
        %709 = vmatpush1.bf16.msra.mxu0 0
        %710 = vmatprep.mubr.bf16.mxu0 0
        %711 = vmatmul.mubr.bf16.gmra.mrb[0].mxu0 %v667
        %v712 = vpop.f32.mrb[0].mxu0
        %v713 = vadd.f32 %v608, %v712
        %v714 = vpop.f32.mrb[0].mxu0
        %v715 = vpop.f32.mrb[0].mxu0
        %v716 = vadd.f32 %v613, %v715
        %v717 = vpop.f32.mrb[0].mxu0
        %718 = vmatprep.mubr.bf16.mxu0 0
        %719 = vmatmul.mubr.bf16.gmra.mrb[0].mxu0 %v670
        %v720 = vpop.f32.mrb[0].mxu0
        %v721 = vadd.f32 %v618, %v720
        %v722 = vpop.f32.mrb[0].mxu0
        %v723 = vpop.f32.mrb[0].mxu0
        %v724 = vadd.f32 %v623, %v723
        %v725 = vpop.f32.mrb[0].mxu0
        %726 = vmatprep.mubr.bf16.mxu0 0
        %727 = vmatmul.mubr.bf16.gmra.mrb[0].mxu0 %v673
        %v728 = vpop.f32.mrb[0].mxu0
        %v729 = vadd.f32 %v628, %v728
        %v730 = vpop.f32.mrb[0].mxu0
        %v731 = vpop.f32.mrb[0].mxu0
        %v732 = vadd.f32 %v633, %v731
        %v733 = vpop.f32.mrb[0].mxu0
        %734 = vmatprep.mubr.bf16.mxu0 0
        %735 = vmatmul.mubr.bf16.gmra.mrb[0].mxu0 %v676
        %v736 = vpop.f32.mrb[0].mxu0
        %v737 = vadd.f32 %v638, %v736
        %v738 = vpop.f32.mrb[0].mxu0
        %v739 = vpop.f32.mrb[0].mxu0
        %v740 = vadd.f32 %v643, %v739
        %v741 = vpop.f32.mrb[0].mxu0
        %742 = vdwg.mxu0
        %vm743 = vcmp.gt.f32.partialorder %v713, 0.0
        %vm744 = vcmp.gt.f32.partialorder %v716, 0.0
        %vm745 = vcmp.gt.f32.partialorder %v721, 0.0
        %vm746 = vcmp.gt.f32.partialorder %v724, 0.0
        %vm747 = vcmp.gt.f32.partialorder %v729, 0.0
        %vm748 = vcmp.gt.f32.partialorder %v732, 0.0
        %vm749 = vcmp.gt.f32.partialorder %v737, 0.0
        %vm750 = vcmp.gt.f32.partialorder %v740, 0.0
        %v751 = vmin.f32 %v713, 0.0
        %v752 = vmin.f32 %v716, 0.0
        %v753 = vmin.f32 %v721, 0.0
        %v754 = vmin.f32 %v724, 0.0
        %v755 = vmin.f32 %v729, 0.0
        %v756 = vmin.f32 %v732, 0.0
        %v757 = vmin.f32 %v737, 0.0
        %v758 = vmin.f32 %v740, 0.0
        %v759 = vmul.f32 %v751, 1.442695
        %v760 = vpow.pop %v759
        %v761 = vmul.f32 %v752, 1.442695
        %v762 = vpow.pop %v761
        %v763 = vmul.f32 %v753, 1.442695
        %v764 = vpow.pop %v763
        %v765 = vmul.f32 %v754, 1.442695
        %v766 = vpow.pop %v765
        %v767 = vmul.f32 %v755, 1.442695
        %v768 = vpow.pop %v767
        %v769 = vmul.f32 %v756, 1.442695
        %v770 = vpow.pop %v769
        %v771 = vmul.f32 %v757, 1.442695
        %v772 = vpow.pop %v771
        %v773 = vmul.f32 %v758, 1.442695
        %v774 = vpow.pop %v773
        %v775 = vsub.f32 %v760, 1.0
        %v776 = vsub.f32 %v762, 1.0
        %v777 = vsub.f32 %v764, 1.0
        %v778 = vsub.f32 %v766, 1.0
        %v779 = vsub.f32 %v768, 1.0
        %v780 = vsub.f32 %v770, 1.0
        %v781 = vsub.f32 %v772, 1.0
        %v782 = vsub.f32 %v774, 1.0
        %v783 = vsel %vm743, %v713, %v775
        %v784 = vsel %vm744, %v716, %v776
        %v785 = vsel %vm745, %v721, %v777
        %v786 = vsel %vm746, %v724, %v778
        %v787 = vsel %vm747, %v729, %v779
        %v788 = vsel %vm748, %v732, %v780
        %v789 = vsel %vm749, %v737, %v781
        %v790 = vsel %vm750, %v740, %v782
        %v791 = vld [vmem:[%s5] sm:$0xf]
        %v792 = vld [vmem:[%s5 + $0x4] sm:$0xf]
        %v793 = vld [vmem:[%s5 + $0x8] sm:$0xf]
        %v794 = vld [vmem:[%s5 + $0xc] sm:$0xf]
        %v795 = vpack.c.bf16 %v784, %v783
        %v796 = vpack.c.bf16 %v786, %v785
        %v797 = vpack.c.bf16 %v788, %v787
        %v798 = vpack.c.bf16 %v790, %v789
        %v799 = vld [vmem:[%s6] sm:$0xff]
        %v800 = vld [vmem:[%s6 + $0x8] sm:$0xff]
        %v801 = vld [vmem:[%s6 + $0x10] sm:$0xff]
        %v802 = vld [vmem:[%s6 + $0x18] sm:$0xff]
        %804 = vset.pattern.permute.xlu0 0
        %805 = vperm.xlu0 %804, %v799
        %v806 = vpop.permute.xlu0 %805
        %809 = vset.pattern.permute.xlu0 0
        %810 = vperm.xlu0 %809, %v800
        %v811 = vpop.permute.xlu0 %810
        %814 = vset.pattern.permute.xlu0 0
        %815 = vperm.xlu0 %814, %v801
        %v816 = vpop.permute.xlu0 %815
        %819 = vset.pattern.permute.xlu0 0
        %820 = vperm.xlu0 %819, %v802
        %v821 = vpop.permute.xlu0 %820
        %v827 = vunpack.c.l.b16 %v791
        %v828 = vunpack.c.l.b16 %v792
        %v829 = vunpack.c.l.b16 %v793
        %v830 = vunpack.c.l.b16 %v794
        %v831 = vpack.c.b16 %v828, %v827
        %v832 = vpack.c.b16 %v830, %v829
        %v834 = vsel %vm665, %v831, 0
        %v837 = vsel %vm665, %v832, 0
        %839 = vmatprep.subr.bf16.mxu0 0
        %840 = vmatpush1.bf16.msra.mxu0 %v795
        %841 = vmatprep.subr.bf16.mxu0 0
        %842 = vmatpush1.bf16.msra.mxu0 %v796
        %843 = vmatprep.subr.bf16.mxu0 0
        %844 = vmatpush1.bf16.msra.mxu0 %v797
        %845 = vmatprep.subr.bf16.mxu0 0
        %846 = vmatpush1.bf16.msra.mxu0 %v798
        %847 = vmatprep.subr.bf16.mxu0 0
        %848 = vmatpush1.bf16.msra.mxu0 0
        %849 = vmatprep.subr.bf16.mxu0 0
        %850 = vmatpush1.bf16.msra.mxu0 0
        %851 = vmatprep.subr.bf16.mxu0 0
        %852 = vmatpush1.bf16.msra.mxu0 0
        %853 = vmatprep.subr.bf16.mxu0 0
        %854 = vmatpush1.bf16.msra.mxu0 0
        %855 = vmatprep.subr.bf16.mxu0 0
        %856 = vmatpush1.bf16.msra.mxu0 0
        %857 = vmatprep.subr.bf16.mxu0 0
        %858 = vmatpush1.bf16.msra.mxu0 0
        %859 = vmatprep.subr.bf16.mxu0 0
        %860 = vmatpush1.bf16.msra.mxu0 0
        %861 = vmatprep.subr.bf16.mxu0 0
        %862 = vmatpush1.bf16.msra.mxu0 0
        %863 = vmatprep.subr.bf16.mxu0 0
        %864 = vmatpush1.bf16.msra.mxu0 0
        %865 = vmatprep.subr.bf16.mxu0 0
        %866 = vmatpush1.bf16.msra.mxu0 0
        %867 = vmatprep.subr.bf16.mxu0 0
        %868 = vmatpush1.bf16.msra.mxu0 0
        %869 = vmatprep.subr.bf16.mxu0 0
        %870 = vmatpush1.bf16.msra.mxu0 0
        %871 = vmatprep.mubr.bf16.mxu0 0
        %872 = vmatmul.mubr.bf16.gmra.mrb[0].mxu0 %v834
        %v873 = vpop.f32.mrb[0].mxu0
        %v874 = vadd.f32 %v806, %v873
        %v875 = vpop.f32.mrb[0].mxu0
        %v876 = vpop.f32.mrb[0].mxu0
        %v877 = vadd.f32 %v811, %v876
        %v878 = vpop.f32.mrb[0].mxu0
        %879 = vmatprep.mubr.bf16.mxu0 0
        %880 = vmatmul.mubr.bf16.gmra.mrb[0].mxu0 %v837
        %v881 = vpop.f32.mrb[0].mxu0
        %v882 = vadd.f32 %v816, %v881
        %v883 = vpop.f32.mrb[0].mxu0
        %v884 = vpop.f32.mrb[0].mxu0
        %v885 = vadd.f32 %v821, %v884
        %v886 = vpop.f32.mrb[0].mxu0
        %887 = vdwg.mxu0
        %v888 = vmax.f32 %v874, 0.0
        %v889 = vmax.f32 %v877, 0.0
        %v890 = vmax.f32 %v882, 0.0
        %v891 = vmax.f32 %v885, 0.0
        %v892 = vld [vmem:[%s7] sm:$0xff]
        %v893 = vld [vmem:[%s7 + $0x8] sm:$0xff]
        %v894 = vld [vmem:[%s7 + $0x10] sm:$0xff]
        %v895 = vld [vmem:[%s7 + $0x18] sm:$0xff]
        %897 = vset.pattern.permute.xlu0 0
        %898 = vperm.xlu0 %897, %v892
        %v899 = vpop.permute.xlu0 %898
        %902 = vset.pattern.permute.xlu0 0
        %903 = vperm.xlu0 %902, %v893
        %v904 = vpop.permute.xlu0 %903
        %907 = vset.pattern.permute.xlu0 0
        %908 = vperm.xlu0 %907, %v894
        %v909 = vpop.permute.xlu0 %908
        %912 = vset.pattern.permute.xlu0 0
        %913 = vperm.xlu0 %912, %v895
        %v914 = vpop.permute.xlu0 %913
        %v916 = vmul.f32 %v888, %v899
        %v917 = vmul.f32 %v889, %v904
        %v918 = vmul.f32 %v890, %v909
        %v919 = vmul.f32 %v891, %v914
        %v920 = vadd.f32 %v916, %v917
        %v921 = vadd.f32 %v920, %v918
        %v922 = vadd.f32 %v921, %v919
        %v923 = vrot.slane %v922, 4
        %v924 = vadd.f32 %v922, %v923
        %v925 = vrot.slane %v924, 2
        %v926 = vadd.f32 %v924, %v925
        %v927 = vrot.slane %v926, 1
        %v928 = vadd.f32 %v926, %v927
        %v929 = vld [vmem:[#allocation2] sm:$0x1]
        %931 = vset.pattern.permute.xlu0 0
        %932 = vperm.xlu0 %931, %v929
        %v933 = vpop.permute.xlu0 %932
        %v935 = vlaneseq
        %v936 = vshrl.u32 %v935, 7
        %v937 = vsub.s32 0, %v936
        %v938 = vrot.slane %v933, %v937
        %v939 = vadd.f32 %v928, %v938
        %v940 = vmul.f32 %v939, 0.5
        %v941 = vtanh.pop %v940
        %v942 = vadd.f32 %v941, 1.0
        %v943 = vmul.f32 %v942, 0.5
        %944 = vst [vmem:[%s327] sm:$0x1] %v943
        %s945 = sand.u32 %s227, 1
        %s946 = scalar_lea.sflag [#allocation4], %s945
        %s947 = sand.u32 %s227, 1
        %s948 = scalar_lea.vmem [#allocation3], %s947
        // Predicated region
        $region57: #{tpu_custom_call.1} parent=55 // pred_check
          %p949 = pneg %p237
        $region58: #{tpu_custom_call.1} parent=55 // pred_check_branch
          %951 = sbr.rel (%p949) target = $region60
        $region59: #{tpu_custom_call.1} parent=55 // pred_region
          %s953 = ssub.s32 16, 16
          %954 = vsyncadd %s946, %s953
          %s955 = smul.addr %s25, 16
          %s956 = scalar_lea.hbm %s9, %s955
          %s958 = sshll.u32 %s948, 4
          %s959 = int_to_ptr.vmem [resolvable:$true] %s958
          %961 = dma.vmem_to_hbm [thread:$0]  %s959, 16, %s956, %s946
        $region60: #{tpu_custom_call.1} parent=55 // pred_fallthru
          _
      $region56: #{tpu_custom_call.1} parent=5 // pred_fallthru
        _
      %p962 = scmp.le.s32.totalorder 2, %s20
      // Predicated region
      $region61: #{tpu_custom_call.1} parent=5 // pred_check
        %p963 = pneg %p962
      $region62: #{tpu_custom_call.1} parent=5 // pred_check_branch
        %965 = sbr.rel (%p963) target = $region64
      $region63: #{tpu_custom_call.1} parent=5 // pred_region
        %s966 = ssub.s32 %s20, 2
        // Predicated region
        $region65: #{tpu_custom_call.1} parent=63 // pred_check
          %p967 = pneg %p243
        $region66: #{tpu_custom_call.1} parent=63 // pred_check_branch
          %969 = sbr.rel (%p967) target = $region68
        $region67: #{tpu_custom_call.1} parent=63 // pred_region
          %s970 = sand.u32 %s228, 1
          %s971 = scalar_lea.sflag [#allocation4], %s970
          %s972 = sand.u32 %s228, 1
          %s973 = scalar_lea.vmem [#allocation3], %s972
          %974 = dma.done %s971, 16
        $region68: #{tpu_custom_call.1} parent=63 // pred_fallthru
          _
      $region64: #{tpu_custom_call.1} parent=5 // pred_fallthru
        _
    $region6: #{tpu_custom_call.1} parent=1 // loop_footer
      %s24 = sadd.s32 1, %s20
    $region7: #{tpu_custom_call.1} parent=1 // loop_footer_branch
      %19 = sbr.rel target = $region3
    $region8: #{tpu_custom_call.1} parent=1 // loop_exit
      _
    %975 = vsyncpa [#allocation4], 1
    %s976 = scalar_lea.sflag [#allocation4], 1
    %977 = vsyncpa %s976, 1

</llo_original>
